<compile_context>
chip_gen: v5e
topology: v5e:2x2
jax: 0.10.0
libtpu: 0.0.40
codegen_flags: <defaults>
</compile_context>

<pallas_src>
import functools

import jax
import jax.numpy as jnp
from jax.experimental import pallas as pl
from jax.experimental.pallas import tpu as pltpu


def _eff_attn_kernel(x_ref, wr_ref, wqkv_ref, wp_ref, bp_ref, o_ref, attn_ref,
                     *, num_heads, head_dim):
    # x_ref:    (chunk, dim)   one sequence chunk of one batch element
    # wr_ref:   (dim, C)       reduce weight, pre-transposed (y = x @ w)
    # wqkv_ref: (C, 3C)        qkv weight, pre-transposed; scale folded into q cols
    # wp_ref:   (C, dim)       proj weight, pre-transposed
    # bp_ref:   (1, dim)       proj bias (f32)
    # attn_ref: (chunk, C)     VMEM scratch for the concatenated head outputs
    x = x_ref[...]
    dtype = x.dtype
    C = wr_ref.shape[1]
    hd = head_dim

    # reduce: Linear(dim, C, bias=False) -- full-width MXU matmul, f32 accumulate.
    xr = jnp.dot(x, wr_ref[...],
                 preferred_element_type=jnp.float32).astype(dtype)

    # qkv: Linear(C, 3C, bias=False); columns are [q | k | v], head-major.
    # Cast back to the activation dtype so the attention matmuls use the native
    # bf16 MXU path when activations are bf16 (f32 accumulation kept below).
    qkv = jnp.dot(xr, wqkv_ref[...],
                  preferred_element_type=jnp.float32).astype(dtype)
    q = qkv[:, 0 * C:1 * C]
    k = qkv[:, 1 * C:2 * C]
    v = qkv[:, 2 * C:3 * C]

    # Head-batched attention.  Relayout from lane-blocked (chunk, C) with
    # head-major columns to head-batched (H, chunk, hd), expressed as a stack
    # of static lane slices along a new leading (untiled) axis -- ops Mosaic
    # lowers reliably (a minor-dim-splitting reshape expresses the same data
    # movement but is less portable across Mosaic versions).
    q3 = jnp.stack([q[:, h * hd:(h + 1) * hd] for h in range(num_heads)])
    k3 = jnp.stack([k[:, h * hd:(h + 1) * hd] for h in range(num_heads)])
    v3 = jnp.stack([v[:, h * hd:(h + 1) * hd] for h in range(num_heads)])

    # Scores (softmax scale already folded into the q weight columns).
    s = jnp.einsum('hqd,hkd->hqk', q3, k3,
                   preferred_element_type=jnp.float32)        # (H, chunk, chunk)
    s = s - jnp.max(s, axis=-1, keepdims=True)                # stable softmax
    e = jnp.exp(s)
    # EUP approximate reciprocal instead of a VPU divide chain.
    p = e * pl.reciprocal(jnp.sum(e, axis=-1, keepdims=True), approx=True)
    # TODO(synk): attn_drop is identity at p=0.0 (inference); stochastic
    # dropout is not implemented.

    o3 = jnp.einsum('hqk,hkd->hqd', p.astype(dtype), v3,
                    preferred_element_type=jnp.float32)       # (H, chunk, hd)

    # Concat-free epilogue: write per-head outputs into the (chunk, C) scratch
    # with lane-slice stores, then one full-contraction projection matmul.
    for h in range(num_heads):
        attn_ref[:, h * hd:(h + 1) * hd] = o3[h].astype(dtype)

    # proj: Linear(C, dim, bias=True)
    y = jnp.dot(attn_ref[...], wp_ref[...],
                preferred_element_type=jnp.float32) + bp_ref[...]
    o_ref[...] = y.astype(o_ref.dtype)


def eff_attention_forward(x, w_reduce, w_qkv, w_proj, b_proj, *, num_heads=8):
    """EffAttention forward (inference: attn_drop is identity).

    x: (B, N, dim); PyTorch-layout weights:
      w_reduce: (dim//2, dim), w_qkv: (3*dim//2, dim//2),
      w_proj: (dim, dim//2), b_proj: (dim,).
    Requires N % 4 == 0 (4 equal chunks) and (N // 4) % 8 == 0 (sublane-aligned
    chunk rows).
    """
    B, N, dim = x.shape
    assert dim % 2 == 0
    C = dim // 2
    assert C % num_heads == 0
    head_dim = C // num_heads
    # PyTorch quirk: scale uses the PRE-reduce head dim (dim // num_heads).
    scale = float((dim // num_heads) ** -0.5)
    # torch.split(..., math.ceil(N // 4)) gives 4 equal chunks when N % 4 == 0.
    assert N % 4 == 0, "EffAttention Pallas kernel requires N % 4 == 0"
    chunk = N // 4
    assert chunk % 8 == 0, "chunk rows (N // 4) must be a multiple of 8"
    # TODO(synk): ragged chunking (N % 4 != 0) and row padding (chunk % 8 != 0)
    # are not implemented.

    dtype = x.dtype
    # Keep weights in the activation dtype (no forced f32 upcast); matmuls still
    # accumulate in f32 inside the kernel.
    wr_t = jnp.transpose(w_reduce).astype(dtype)               # (dim, C)
    wqkv_t = jnp.transpose(w_qkv)                              # (C, 3C)
    # Fold the softmax scale into the q columns (zero runtime cost in-kernel).
    wqkv_t = wqkv_t.at[:, :C].multiply(scale).astype(dtype)
    wp_t = jnp.transpose(w_proj).astype(dtype)                 # (C, dim)
    bp = b_proj.reshape(1, dim).astype(jnp.float32)

    kernel = functools.partial(_eff_attn_kernel,
                               num_heads=num_heads, head_dim=head_dim)

    return pl.pallas_call(
        kernel,
        out_shape=jax.ShapeDtypeStruct((B, N, dim), dtype),
        grid_spec=pltpu.PrefetchScalarGridSpec(
            num_scalar_prefetch=0,
            grid=(B, 4),
            in_specs=[
                # Squeezed leading batch dim: kernel sees a (chunk, dim) tile.
                pl.BlockSpec((None, chunk, dim), lambda b, c: (b, c, 0)),
                # Grid-invariant weight blocks (fetched once by the pipeliner).
                pl.BlockSpec((dim, C), lambda b, c: (0, 0)),
                pl.BlockSpec((C, 3 * C), lambda b, c: (0, 0)),
                pl.BlockSpec((C, dim), lambda b, c: (0, 0)),
                pl.BlockSpec((1, dim), lambda b, c: (0, 0)),
            ],
            out_specs=pl.BlockSpec((None, chunk, dim), lambda b, c: (b, c, 0)),
            scratch_shapes=[pltpu.VMEM((chunk, C), dtype)],
        ),
        compiler_params=pltpu.CompilerParams(
            # Batch and chunk axes are independent -> shardable across the
            # 2 TensorCores on v7x.
            dimension_semantics=("parallel", "parallel"),
            vmem_limit_bytes=32 * 1024 * 1024,
        ),
    )(x, wr_t, wqkv_t, wp_t, bp)


def init_eff_attention_params(key, dim, num_heads):
    """Deterministic init mirroring nn.Linear defaults (uniform +-1/sqrt(fan_in))."""
    del num_heads
    C = dim // 2
    k1, k2, k3, k4 = jax.random.split(key, 4)

    def u(k, shape, fan_in):
        bound = 1.0 / (fan_in ** 0.5)
        return jax.random.uniform(k, shape, jnp.float32, -bound, bound)

    w_reduce = u(k1, (C, dim), dim)        # Linear(dim, C), bias=False
    w_qkv = u(k2, (3 * C, C), C)           # Linear(C, 3C), bias=False
    w_proj = u(k3, (dim, C), C)            # Linear(C, dim)
    b_proj = u(k4, (dim,), C)
    return w_reduce, w_qkv, w_proj, b_proj


def _eff_attention_ref(x, w_reduce, w_qkv, w_proj, b_proj, num_heads):
    """Plain-JAX reference matching the PyTorch forward exactly."""
    B, N, dim = x.shape
    C = dim // 2
    hd = C // num_heads
    scale = (dim // num_heads) ** -0.5
    xr = x @ w_reduce.T                                        # (B, N, C)
    qkv = (xr @ w_qkv.T).reshape(B, N, 3, num_heads, hd)
    qkv = jnp.transpose(qkv, (2, 0, 3, 1, 4))                  # (3, B, H, N, hd)
    q, k, v = qkv[0], qkv[1], qkv[2]
    chunk = N // 4
    outs = []
    for c0 in range(0, N, chunk):
        qc, kc, vc = (t[:, :, c0:c0 + chunk] for t in (q, k, v))
        attn = jnp.einsum("bhqd,bhkd->bhqk", qc, kc) * scale
        attn = jax.nn.softmax(attn, axis=-1)
        oc = jnp.einsum("bhqk,bhkd->bhqd", attn, vc)
        outs.append(jnp.transpose(oc, (0, 2, 1, 3)))           # (B, chunk, H, hd)
    o = jnp.concatenate(outs, axis=1).reshape(B, N, C)
    return o @ w_proj.T + b_proj


if __name__ == "__main__":
    key = jax.random.PRNGKey(0)
    kx, kp = jax.random.split(key)

    # Small but alignment-friendly shapes: N % 32 == 0 so each of the 4
    # sequence chunks is a multiple of 8 rows; dim=128 -> C=64, head_dim=8.
    B, N, dim, num_heads = 2, 32, 128, 8
    x = jax.random.normal(kx, (B, N, dim), jnp.float32)
    w_reduce, w_qkv, w_proj, b_proj = init_eff_attention_params(kp, dim, num_heads)

    out = eff_attention_forward(x, w_reduce, w_qkv, w_proj, b_proj,
                                num_heads=num_heads)
    out = jax.block_until_ready(out)

    ref = _eff_attention_ref(x, w_reduce, w_qkv, w_proj, b_proj, num_heads)
    assert out.shape == (B, N, dim)
    # Tolerance covers the EUP approximate-reciprocal softmax denominator and
    # exp / accumulation-order differences vs. the plain-JAX reference.
    assert jnp.allclose(out, ref, atol=2e-2, rtol=2e-2), \
        float(jnp.max(jnp.abs(out - ref)))

    print("KERNEL_OK")
</pallas_src>

<mosaic_0001>
module attributes {stable_mosaic.version = 11 : i64} {
  func.func @_eff_attn_kernel(%arg0: i32, %arg1: i32, %arg2: memref<1x8x128xf32, #tpu.memory_space<vmem>>, %arg3: memref<128x64xf32, #tpu.memory_space<vmem>>, %arg4: memref<64x192xf32, #tpu.memory_space<vmem>>, %arg5: memref<64x128xf32, #tpu.memory_space<vmem>>, %arg6: memref<1x128xf32, #tpu.memory_space<vmem>>, %arg7: memref<1x8x128xf32, #tpu.memory_space<vmem>>, %arg8: memref<8x64xf32, #tpu.memory_space<vmem>>) attributes {dimension_semantics = [#tpu.dimension_semantics<parallel>, #tpu.dimension_semantics<parallel>], iteration_bounds = array<i64: 2, 4>, scalar_prefetch = 0 : i64, scratch_operands = 1 : i64, tpu.core_type = #tpu.core_type<tc>, window_params = [{transform_indices = @transform_0, window_bounds = array<i64: 1, 8, 128>}, {pipeline_mode = #tpu.pipeline_mode<synchronous>, transform_indices = @transform_1, window_bounds = array<i64: 128, 64>}, {pipeline_mode = #tpu.pipeline_mode<synchronous>, transform_indices = @transform_2, window_bounds = array<i64: 64, 192>}, {pipeline_mode = #tpu.pipeline_mode<synchronous>, transform_indices = @transform_3, window_bounds = array<i64: 64, 128>}, {pipeline_mode = #tpu.pipeline_mode<synchronous>, transform_indices = @transform_4, window_bounds = array<i64: 1, 128>}, {transform_indices = @transform_5, window_bounds = array<i64: 1, 8, 128>}]} {
    %c0 = arith.constant 0 : index
    %c0_0 = arith.constant 0 : index
    %c0_1 = arith.constant 0 : index
    %0 = vector.load %arg2[%c0, %c0_0, %c0_1] : memref<1x8x128xf32, #tpu.memory_space<vmem>>, vector<1x8x128xf32>
    %1 = vector.shape_cast %0 : vector<1x8x128xf32> to vector<8x128xf32>
    %c0_2 = arith.constant 0 : index
    %c0_3 = arith.constant 0 : index
    %2 = vector.load %arg3[%c0_2, %c0_3] : memref<128x64xf32, #tpu.memory_space<vmem>>, vector<128x64xf32>
    %cst = arith.constant dense<0.000000e+00> : vector<8x64xf32>
    %3 = tpu.matmul %1, %2, %cst {dimension_numbers = #tpu.dot_dimension_numbers<[1], [0], [0], [1], [0, 0, 1, 1], [], []>} : vector<8x128xf32>, vector<128x64xf32>, vector<8x64xf32> -> vector<8x64xf32>
    %c0_4 = arith.constant 0 : index
    %c0_5 = arith.constant 0 : index
    %4 = vector.load %arg4[%c0_4, %c0_5] : memref<64x192xf32, #tpu.memory_space<vmem>>, vector<64x192xf32>
    %cst_6 = arith.constant dense<0.000000e+00> : vector<8x192xf32>
    %5 = tpu.matmul %3, %4, %cst_6 {dimension_numbers = #tpu.dot_dimension_numbers<[1], [0], [0], [1], [0, 0, 1, 1], [], []>} : vector<8x64xf32>, vector<64x192xf32>, vector<8x192xf32> -> vector<8x192xf32>
    %6 = vector.extract_strided_slice %5 {offsets = [0, 0], sizes = [8, 64], strides = [1, 1]} : vector<8x192xf32> to vector<8x64xf32>
    %7 = vector.extract_strided_slice %5 {offsets = [0, 64], sizes = [8, 64], strides = [1, 1]} : vector<8x192xf32> to vector<8x64xf32>
    %8 = vector.extract_strided_slice %5 {offsets = [0, 128], sizes = [8, 64], strides = [1, 1]} : vector<8x192xf32> to vector<8x64xf32>
    %9 = vector.extract_strided_slice %6 {offsets = [0, 0], sizes = [8, 8], strides = [1, 1]} : vector<8x64xf32> to vector<8x8xf32>
    %10 = vector.extract_strided_slice %6 {offsets = [0, 8], sizes = [8, 8], strides = [1, 1]} : vector<8x64xf32> to vector<8x8xf32>
    %11 = vector.extract_strided_slice %6 {offsets = [0, 16], sizes = [8, 8], strides = [1, 1]} : vector<8x64xf32> to vector<8x8xf32>
    %12 = vector.extract_strided_slice %6 {offsets = [0, 24], sizes = [8, 8], strides = [1, 1]} : vector<8x64xf32> to vector<8x8xf32>
    %13 = vector.extract_strided_slice %6 {offsets = [0, 32], sizes = [8, 8], strides = [1, 1]} : vector<8x64xf32> to vector<8x8xf32>
    %14 = vector.extract_strided_slice %6 {offsets = [0, 40], sizes = [8, 8], strides = [1, 1]} : vector<8x64xf32> to vector<8x8xf32>
    %15 = vector.extract_strided_slice %6 {offsets = [0, 48], sizes = [8, 8], strides = [1, 1]} : vector<8x64xf32> to vector<8x8xf32>
    %16 = vector.extract_strided_slice %6 {offsets = [0, 56], sizes = [8, 8], strides = [1, 1]} : vector<8x64xf32> to vector<8x8xf32>
    %17 = vector.shape_cast %9 : vector<8x8xf32> to vector<1x8x8xf32>
    %18 = vector.shape_cast %10 : vector<8x8xf32> to vector<1x8x8xf32>
    %19 = vector.shape_cast %11 : vector<8x8xf32> to vector<1x8x8xf32>
    %20 = vector.shape_cast %12 : vector<8x8xf32> to vector<1x8x8xf32>
    %21 = vector.shape_cast %13 : vector<8x8xf32> to vector<1x8x8xf32>
    %22 = vector.shape_cast %14 : vector<8x8xf32> to vector<1x8x8xf32>
    %23 = vector.shape_cast %15 : vector<8x8xf32> to vector<1x8x8xf32>
    %24 = vector.shape_cast %16 : vector<8x8xf32> to vector<1x8x8xf32>
    %25 = tpu.concatenate %17, %18, %19, %20, %21, %22, %23, %24 in 0 : vector<1x8x8xf32>, vector<1x8x8xf32>, vector<1x8x8xf32>, vector<1x8x8xf32>, vector<1x8x8xf32>, vector<1x8x8xf32>, vector<1x8x8xf32>, vector<1x8x8xf32> -> vector<8x8x8xf32>
    %26 = vector.extract_strided_slice %7 {offsets = [0, 0], sizes = [8, 8], strides = [1, 1]} : vector<8x64xf32> to vector<8x8xf32>
    %27 = vector.extract_strided_slice %7 {offsets = [0, 8], sizes = [8, 8], strides = [1, 1]} : vector<8x64xf32> to vector<8x8xf32>
    %28 = vector.extract_strided_slice %7 {offsets = [0, 16], sizes = [8, 8], strides = [1, 1]} : vector<8x64xf32> to vector<8x8xf32>
    %29 = vector.extract_strided_slice %7 {offsets = [0, 24], sizes = [8, 8], strides = [1, 1]} : vector<8x64xf32> to vector<8x8xf32>
    %30 = vector.extract_strided_slice %7 {offsets = [0, 32], sizes = [8, 8], strides = [1, 1]} : vector<8x64xf32> to vector<8x8xf32>
    %31 = vector.extract_strided_slice %7 {offsets = [0, 40], sizes = [8, 8], strides = [1, 1]} : vector<8x64xf32> to vector<8x8xf32>
    %32 = vector.extract_strided_slice %7 {offsets = [0, 48], sizes = [8, 8], strides = [1, 1]} : vector<8x64xf32> to vector<8x8xf32>
    %33 = vector.extract_strided_slice %7 {offsets = [0, 56], sizes = [8, 8], strides = [1, 1]} : vector<8x64xf32> to vector<8x8xf32>
    %34 = vector.shape_cast %26 : vector<8x8xf32> to vector<1x8x8xf32>
    %35 = vector.shape_cast %27 : vector<8x8xf32> to vector<1x8x8xf32>
    %36 = vector.shape_cast %28 : vector<8x8xf32> to vector<1x8x8xf32>
    %37 = vector.shape_cast %29 : vector<8x8xf32> to vector<1x8x8xf32>
    %38 = vector.shape_cast %30 : vector<8x8xf32> to vector<1x8x8xf32>
    %39 = vector.shape_cast %31 : vector<8x8xf32> to vector<1x8x8xf32>
    %40 = vector.shape_cast %32 : vector<8x8xf32> to vector<1x8x8xf32>
    %41 = vector.shape_cast %33 : vector<8x8xf32> to vector<1x8x8xf32>
    %42 = tpu.concatenate %34, %35, %36, %37, %38, %39, %40, %41 in 0 : vector<1x8x8xf32>, vector<1x8x8xf32>, vector<1x8x8xf32>, vector<1x8x8xf32>, vector<1x8x8xf32>, vector<1x8x8xf32>, vector<1x8x8xf32>, vector<1x8x8xf32> -> vector<8x8x8xf32>
    %43 = vector.extract_strided_slice %8 {offsets = [0, 0], sizes = [8, 8], strides = [1, 1]} : vector<8x64xf32> to vector<8x8xf32>
    %44 = vector.extract_strided_slice %8 {offsets = [0, 8], sizes = [8, 8], strides = [1, 1]} : vector<8x64xf32> to vector<8x8xf32>
    %45 = vector.extract_strided_slice %8 {offsets = [0, 16], sizes = [8, 8], strides = [1, 1]} : vector<8x64xf32> to vector<8x8xf32>
    %46 = vector.extract_strided_slice %8 {offsets = [0, 24], sizes = [8, 8], strides = [1, 1]} : vector<8x64xf32> to vector<8x8xf32>
    %47 = vector.extract_strided_slice %8 {offsets = [0, 32], sizes = [8, 8], strides = [1, 1]} : vector<8x64xf32> to vector<8x8xf32>
    %48 = vector.extract_strided_slice %8 {offsets = [0, 40], sizes = [8, 8], strides = [1, 1]} : vector<8x64xf32> to vector<8x8xf32>
    %49 = vector.extract_strided_slice %8 {offsets = [0, 48], sizes = [8, 8], strides = [1, 1]} : vector<8x64xf32> to vector<8x8xf32>
    %50 = vector.extract_strided_slice %8 {offsets = [0, 56], sizes = [8, 8], strides = [1, 1]} : vector<8x64xf32> to vector<8x8xf32>
    %51 = vector.shape_cast %43 : vector<8x8xf32> to vector<1x8x8xf32>
    %52 = vector.shape_cast %44 : vector<8x8xf32> to vector<1x8x8xf32>
    %53 = vector.shape_cast %45 : vector<8x8xf32> to vector<1x8x8xf32>
    %54 = vector.shape_cast %46 : vector<8x8xf32> to vector<1x8x8xf32>
    %55 = vector.shape_cast %47 : vector<8x8xf32> to vector<1x8x8xf32>
    %56 = vector.shape_cast %48 : vector<8x8xf32> to vector<1x8x8xf32>
    %57 = vector.shape_cast %49 : vector<8x8xf32> to vector<1x8x8xf32>
    %58 = vector.shape_cast %50 : vector<8x8xf32> to vector<1x8x8xf32>
    %59 = tpu.concatenate %51, %52, %53, %54, %55, %56, %57, %58 in 0 : vector<1x8x8xf32>, vector<1x8x8xf32>, vector<1x8x8xf32>, vector<1x8x8xf32>, vector<1x8x8xf32>, vector<1x8x8xf32>, vector<1x8x8xf32>, vector<1x8x8xf32> -> vector<8x8x8xf32>
    "tpu.trace_start"() <{level = 10 : i32, message = "hqd,hkd->hqk"}> : () -> ()
    %cst_7 = arith.constant dense<0.000000e+00> : vector<8x8x8xf32>
    %60 = tpu.matmul %25, %42, %cst_7 {dimension_numbers = #tpu.dot_dimension_numbers<[2], [2], [1], [1], [0, 0, 0, 1, 1, 1], [0], [0]>} : vector<8x8x8xf32>, vector<8x8x8xf32>, vector<8x8x8xf32> -> vector<8x8x8xf32>
    "tpu.trace_stop"() : () -> ()
    %cst_8 = arith.constant dense<0xFF800000> : vector<8x8xf32>
    %61 = vector.multi_reduction <maximumf>, %60, %cst_8 [2] : vector<8x8x8xf32> to vector<8x8xf32>
    %62 = vector.shape_cast %61 : vector<8x8xf32> to vector<8x8x1xf32>
    %63 = vector.broadcast %62 : vector<8x8x1xf32> to vector<8x8x8xf32>
    %64 = arith.subf %60, %63 : vector<8x8x8xf32>
    %65 = math.exp %64 : vector<8x8x8xf32>
    %cst_9 = arith.constant dense<0.000000e+00> : vector<8x8xf32>
    %66 = vector.multi_reduction <add>, %65, %cst_9 [2] : vector<8x8x8xf32> to vector<8x8xf32>
    %67 = vector.shape_cast %66 : vector<8x8xf32> to vector<8x8x1xf32>
    %68 = tpu.reciprocal %67 {approx = true} : vector<8x8x1xf32> -> vector<8x8x1xf32>
    %69 = vector.broadcast %68 : vector<8x8x1xf32> to vector<8x8x8xf32>
    %70 = arith.mulf %65, %69 : vector<8x8x8xf32>
    "tpu.trace_start"() <{level = 10 : i32, message = "hqk,hkd->hqd"}> : () -> ()
    %cst_10 = arith.constant dense<0.000000e+00> : vector<8x8x8xf32>
    %71 = tpu.matmul %70, %59, %cst_10 {dimension_numbers = #tpu.dot_dimension_numbers<[2], [1], [1], [2], [0, 0, 0, 1, 1, 2], [0], [0]>} : vector<8x8x8xf32>, vector<8x8x8xf32>, vector<8x8x8xf32> -> vector<8x8x8xf32>
    "tpu.trace_stop"() : () -> ()
    %72 = vector.extract_strided_slice %71 {offsets = [0, 0, 0], sizes = [1, 8, 8], strides = [1, 1, 1]} : vector<8x8x8xf32> to vector<1x8x8xf32>
    %73 = vector.shape_cast %72 : vector<1x8x8xf32> to vector<8x8xf32>
    %c0_11 = arith.constant 0 : index
    %c0_12 = arith.constant 0 : index
    %74 = vector.load %arg8[%c0_11, %c0_12] : memref<8x64xf32, #tpu.memory_space<vmem>>, vector<8x8xf32>
    tpu.vector_store %arg8[%c0_11, %c0_12], %73 {strides = array<i32>} : memref<8x64xf32, #tpu.memory_space<vmem>>, vector<8x8xf32>,
    %75 = vector.extract_strided_slice %71 {offsets = [1, 0, 0], sizes = [1, 8, 8], strides = [1, 1, 1]} : vector<8x8x8xf32> to vector<1x8x8xf32>
    %76 = vector.shape_cast %75 : vector<1x8x8xf32> to vector<8x8xf32>
    %c0_13 = arith.constant 0 : index
    %c8 = arith.constant 8 : index
    %77 = vector.load %arg8[%c0_13, %c8] : memref<8x64xf32, #tpu.memory_space<vmem>>, vector<8x8xf32>
    tpu.vector_store %arg8[%c0_13, %c8], %76 {strides = array<i32>} : memref<8x64xf32, #tpu.memory_space<vmem>>, vector<8x8xf32>,
    %78 = vector.extract_strided_slice %71 {offsets = [2, 0, 0], sizes = [1, 8, 8], strides = [1, 1, 1]} : vector<8x8x8xf32> to vector<1x8x8xf32>
    %79 = vector.shape_cast %78 : vector<1x8x8xf32> to vector<8x8xf32>
    %c0_14 = arith.constant 0 : index
    %c16 = arith.constant 16 : index
    %80 = vector.load %arg8[%c0_14, %c16] : memref<8x64xf32, #tpu.memory_space<vmem>>, vector<8x8xf32>
    tpu.vector_store %arg8[%c0_14, %c16], %79 {strides = array<i32>} : memref<8x64xf32, #tpu.memory_space<vmem>>, vector<8x8xf32>,
    %81 = vector.extract_strided_slice %71 {offsets = [3, 0, 0], sizes = [1, 8, 8], strides = [1, 1, 1]} : vector<8x8x8xf32> to vector<1x8x8xf32>
    %82 = vector.shape_cast %81 : vector<1x8x8xf32> to vector<8x8xf32>
    %c0_15 = arith.constant 0 : index
    %c24 = arith.constant 24 : index
    %83 = vector.load %arg8[%c0_15, %c24] : memref<8x64xf32, #tpu.memory_space<vmem>>, vector<8x8xf32>
    tpu.vector_store %arg8[%c0_15, %c24], %82 {strides = array<i32>} : memref<8x64xf32, #tpu.memory_space<vmem>>, vector<8x8xf32>,
    %84 = vector.extract_strided_slice %71 {offsets = [4, 0, 0], sizes = [1, 8, 8], strides = [1, 1, 1]} : vector<8x8x8xf32> to vector<1x8x8xf32>
    %85 = vector.shape_cast %84 : vector<1x8x8xf32> to vector<8x8xf32>
    %c0_16 = arith.constant 0 : index
    %c32 = arith.constant 32 : index
    %86 = vector.load %arg8[%c0_16, %c32] : memref<8x64xf32, #tpu.memory_space<vmem>>, vector<8x8xf32>
    tpu.vector_store %arg8[%c0_16, %c32], %85 {strides = array<i32>} : memref<8x64xf32, #tpu.memory_space<vmem>>, vector<8x8xf32>,
    %87 = vector.extract_strided_slice %71 {offsets = [5, 0, 0], sizes = [1, 8, 8], strides = [1, 1, 1]} : vector<8x8x8xf32> to vector<1x8x8xf32>
    %88 = vector.shape_cast %87 : vector<1x8x8xf32> to vector<8x8xf32>
    %c0_17 = arith.constant 0 : index
    %c40 = arith.constant 40 : index
    %89 = vector.load %arg8[%c0_17, %c40] : memref<8x64xf32, #tpu.memory_space<vmem>>, vector<8x8xf32>
    tpu.vector_store %arg8[%c0_17, %c40], %88 {strides = array<i32>} : memref<8x64xf32, #tpu.memory_space<vmem>>, vector<8x8xf32>,
    %90 = vector.extract_strided_slice %71 {offsets = [6, 0, 0], sizes = [1, 8, 8], strides = [1, 1, 1]} : vector<8x8x8xf32> to vector<1x8x8xf32>
    %91 = vector.shape_cast %90 : vector<1x8x8xf32> to vector<8x8xf32>
    %c0_18 = arith.constant 0 : index
    %c48 = arith.constant 48 : index
    %92 = vector.load %arg8[%c0_18, %c48] : memref<8x64xf32, #tpu.memory_space<vmem>>, vector<8x8xf32>
    tpu.vector_store %arg8[%c0_18, %c48], %91 {strides = array<i32>} : memref<8x64xf32, #tpu.memory_space<vmem>>, vector<8x8xf32>,
    %93 = vector.extract_strided_slice %71 {offsets = [7, 0, 0], sizes = [1, 8, 8], strides = [1, 1, 1]} : vector<8x8x8xf32> to vector<1x8x8xf32>
    %94 = vector.shape_cast %93 : vector<1x8x8xf32> to vector<8x8xf32>
    %c0_19 = arith.constant 0 : index
    %c56 = arith.constant 56 : index
    %95 = vector.load %arg8[%c0_19, %c56] : memref<8x64xf32, #tpu.memory_space<vmem>>, vector<8x8xf32>
    tpu.vector_store %arg8[%c0_19, %c56], %94 {strides = array<i32>} : memref<8x64xf32, #tpu.memory_space<vmem>>, vector<8x8xf32>,
    %c0_20 = arith.constant 0 : index
    %c0_21 = arith.constant 0 : index
    %96 = vector.load %arg8[%c0_20, %c0_21] : memref<8x64xf32, #tpu.memory_space<vmem>>, vector<8x64xf32>
    %c0_22 = arith.constant 0 : index
    %c0_23 = arith.constant 0 : index
    %97 = vector.load %arg5[%c0_22, %c0_23] : memref<64x128xf32, #tpu.memory_space<vmem>>, vector<64x128xf32>
    %cst_24 = arith.constant dense<0.000000e+00> : vector<8x128xf32>
    %98 = tpu.matmul %96, %97, %cst_24 {dimension_numbers = #tpu.dot_dimension_numbers<[1], [0], [0], [1], [0, 0, 1, 1], [], []>} : vector<8x64xf32>, vector<64x128xf32>, vector<8x128xf32> -> vector<8x128xf32>
    %c0_25 = arith.constant 0 : index
    %c0_26 = arith.constant 0 : index
    %99 = vector.load %arg6[%c0_25, %c0_26] : memref<1x128xf32, #tpu.memory_space<vmem>>, vector<1x128xf32>
    %100 = vector.broadcast %99 : vector<1x128xf32> to vector<8x128xf32>
    %101 = arith.addf %98, %100 : vector<8x128xf32>
    %c0_27 = arith.constant 0 : index
    %c0_28 = arith.constant 0 : index
    %c0_29 = arith.constant 0 : index
    %102 = vector.load %arg7[%c0_27, %c0_28, %c0_29] : memref<1x8x128xf32, #tpu.memory_space<vmem>>, vector<1x8x128xf32>
    %103 = vector.shape_cast %102 : vector<1x8x128xf32> to vector<8x128xf32>
    %104 = vector.shape_cast %101 : vector<8x128xf32> to vector<1x8x128xf32>
    tpu.vector_store %arg7[%c0_27, %c0_28, %c0_29], %104 {strides = array<i32>} : memref<1x8x128xf32, #tpu.memory_space<vmem>>, vector<1x8x128xf32>,
    return
  }
  func.func @transform_0(%arg0: i32, %arg1: i32) -> (i32, i32, i32) {
    %c0_i32 = arith.constant 0 : i32
    %c0_i32_0 = arith.constant 0 : i32
    return %arg0, %arg1, %c0_i32 : i32, i32, i32
  }
  func.func @transform_1(%arg0: i32, %arg1: i32) -> (i32, i32) {
    %c0_i32 = arith.constant 0 : i32
    %c0_i32_0 = arith.constant 0 : i32
    %c0_i32_1 = arith.constant 0 : i32
    return %c0_i32, %c0_i32_0 : i32, i32
  }
  func.func @transform_2(%arg0: i32, %arg1: i32) -> (i32, i32) {
    %c0_i32 = arith.constant 0 : i32
    %c0_i32_0 = arith.constant 0 : i32
    %c0_i32_1 = arith.constant 0 : i32
    return %c0_i32, %c0_i32_0 : i32, i32
  }
  func.func @transform_3(%arg0: i32, %arg1: i32) -> (i32, i32) {
    %c0_i32 = arith.constant 0 : i32
    %c0_i32_0 = arith.constant 0 : i32
    %c0_i32_1 = arith.constant 0 : i32
    return %c0_i32, %c0_i32_0 : i32, i32
  }
  func.func @transform_4(%arg0: i32, %arg1: i32) -> (i32, i32) {
    %c0_i32 = arith.constant 0 : i32
    %c0_i32_0 = arith.constant 0 : i32
    %c0_i32_1 = arith.constant 0 : i32
    return %c0_i32, %c0_i32_0 : i32, i32
  }
  func.func @transform_5(%arg0: i32, %arg1: i32) -> (i32, i32, i32) {
    %c0_i32 = arith.constant 0 : i32
    %c0_i32_0 = arith.constant 0 : i32
    return %arg0, %arg1, %c0_i32 : i32, i32, i32
  }
}

</mosaic_0001>

<llo_original>
// kernel: tpu_custom_call.1
$region0: #{tpu_custom_call.1}
  #allocation0 [shape = 'u32[]', space=smem, size = 0x4, offset = 0x4, fixed_abs, tag = 'smem constant byte address 0x4 - core index']
  #allocation1 [shape = 'u32[72,128]{1,0:T(1,128)}', space=vmem, size = 0x9000, scoped, tag = 'internal scratch']
  #allocation2 [shape = 'f32[8,64]{1,0:T(8,128)}', space=vmem, size = 0x1000, scoped, tag = 'scratch operand']
  %s0 = inlined_call_operand.vmem [shape: f32[2,32,128], index: 0, kind: input, shape index: {}]
  %s1 = inlined_call_operand.vmem [shape: f32[128,64], index: 1, kind: input, shape index: {}]
  %s2 = inlined_call_operand.vmem [shape: f32[64,192], index: 2, kind: input, shape index: {}]
  %s3 = inlined_call_operand.hbm [shape: f32[64,128], index: 3, kind: input, shape index: {}]
  %s4 = inlined_call_operand.vmem [shape: f32[1,128], index: 4, kind: input, shape index: {}]
  %s5 = inlined_call_operand.hbm [shape: f32[2,32,128], index: 5, kind: output, shape index: {}]
  %s6 = sld [smem:[#allocation0]]
  $region57: #{tpu_custom_call.1} parent=0
    _
  %s8 = ssub.s32 1, %s6
  %s9 = scalar_select 0, %s8, %s6
  $region1: #{tpu_custom_call.1} parent=0
    #allocation3 [shape = 'u8[32768]{0}', space=vmem, size = 0x8000, scoped, tag = 'input window, operand 3, single buffered']
    #allocation4 [shape = 's32[2]{0}', space=sflag, size = 0x8, scoped, tag = 'scoped memory for tpu_custom_call.1']
    #allocation5 [shape = 's32[2]{0}', space=sflag, size = 0x8, scoped, tag = 'scoped memory for tpu_custom_call.1']
    #allocation6 [shape = 'u8[8192]{0}', space=vmem, size = 0x2000, scoped, tag = 'output window, operand 0']
    %10 = vsyncpa [#allocation4], 0
    %11 = vsyncpa [#allocation5], 0
    %s12 = scalar_lea.sflag [#allocation5], 1
    %13 = vsyncpa %s12, 0
    loop: start=0, step=1, limit=10
    $region2: #{tpu_custom_call.1} parent=1 // loop_pre_header
      _
    $region3: #{tpu_custom_call.1} parent=1 // loop_header
      %s15 = sphi 0, %s19
      %p16 = scmp.ge.s32.totalorder %s15, 10
      %s22 = sphi 0, %s34
      %s23 = sphi 0, %s30
      %s24 = sphi 0, %s22
      %s25 = sphi 0, %s23
      %s26 = sphi 0, %s24
      %s27 = sphi 0, %s25
      %s39 = sphi 0, %s41
      %s42 = sphi 0, %s39
      %s43 = sphi 0, %s42
      %s59 = sphi 0, %s43
      %s63 = sphi 0, %s63
      %s65 = sphi 0, %s63
      %s66 = sphi 0, %s65
      %s80 = sphi 0, %s66
      %s84 = sphi 0, %s84
      %s86 = sphi 0, %s84
      %s87 = sphi 0, %s86
      %s101 = sphi 0, %s87
      %s105 = sphi 0, %s105
      %s107 = sphi 0, %s105
      %s108 = sphi 0, %s107
      %s122 = sphi 0, %s108
      %s126 = sphi 0, %s126
      %s128 = sphi 0, %s126
      %s129 = sphi 0, %s128
      %s143 = sphi 0, %s129
      %s151 = sphi 0, %s153
      %s154 = sphi 0, %s151
      %s155 = sphi 0, %s154
      %s171 = sphi 0, %s155
    $region4: #{tpu_custom_call.1} parent=1 // loop_header_branch
      %18 = sbr.rel (%p16) target = $region8
    $region5: #{tpu_custom_call.1} parent=1 // loop_body
      %s20 = ssub.s32 %s15, 1
      %s21 = ssub.s32 %s15, 2
      %s28 = sadd.s32 1, %s23
      %p29 = scmp.ge.s32.totalorder %s28, 4
      %s30 = scalar_select %p29, 0, %s28
      %s31 = sadd.s32 1, %s22
      %s32 = scalar_select %p29, %s31, %s22
      %p33 = scmp.ge.s32.totalorder %s32, 2
      %s34 = scalar_select %p33, 0, %s32
      %s35 = ssub.s32 %s22, %s34
      %s36 = ssub.s32 %s23, %s30
      %s37 = sor.u32 %s35, %s36
      %p38 = scmp.eq.s32.totalorder %s37, 0
      %s40 = sadd.s32 %s39, 1
      %s41 = scalar_select %p38, %s39, %s40
      %p44 = pneg %p38
      %p45 = scmp.eq.s32.totalorder %s15, 7
      %p46 = por %p44, %p45
      %p47 = scmp.ne.s32.totalorder %s39, %s42
      %p48 = scmp.eq.s32.totalorder %s15, 0
      %p49 = por %p47, %p48
      %p50 = scmp.ne.s32.totalorder %s39, %s42
      %p51 = scmp.eq.s32.totalorder %s20, 7
      %p52 = por %p50, %p51
      %p53 = scmp.ne.s32.totalorder %s42, %s43
      %p54 = scmp.eq.s32.totalorder %s20, 0
      %p55 = por %p53, %p54
      %p56 = scmp.ne.s32.totalorder %s42, %s43
      %p57 = scmp.eq.s32.totalorder %s21, 7
      %p58 = por %p56, %p57
      %p60 = scmp.ne.s32.totalorder %s43, %s59
      %p61 = scmp.eq.s32.totalorder %s21, 0
      %p62 = por %p60, %p61
      %s64 = sadd.s32 %s63, 1
      %p67 = scmp.eq.s32.totalorder %s15, 7
      %p68 = scmp.ne.s32.totalorder %s63, %s65
      %p69 = scmp.eq.s32.totalorder %s15, 0
      %p70 = por %p68, %p69
      %p71 = scmp.ne.s32.totalorder %s63, %s65
      %p72 = scmp.eq.s32.totalorder %s20, 7
      %p73 = por %p71, %p72
      %p74 = scmp.ne.s32.totalorder %s65, %s66
      %p75 = scmp.eq.s32.totalorder %s20, 0
      %p76 = por %p74, %p75
      %p77 = scmp.ne.s32.totalorder %s65, %s66
      %p78 = scmp.eq.s32.totalorder %s21, 7
      %p79 = por %p77, %p78
      %p81 = scmp.ne.s32.totalorder %s66, %s80
      %p82 = scmp.eq.s32.totalorder %s21, 0
      %p83 = por %p81, %p82
      %s85 = sadd.s32 %s84, 1
      %p88 = scmp.eq.s32.totalorder %s15, 7
      %p89 = scmp.ne.s32.totalorder %s84, %s86
      %p90 = scmp.eq.s32.totalorder %s15, 0
      %p91 = por %p89, %p90
      %p92 = scmp.ne.s32.totalorder %s84, %s86
      %p93 = scmp.eq.s32.totalorder %s20, 7
      %p94 = por %p92, %p93
      %p95 = scmp.ne.s32.totalorder %s86, %s87
      %p96 = scmp.eq.s32.totalorder %s20, 0
      %p97 = por %p95, %p96
      %p98 = scmp.ne.s32.totalorder %s86, %s87
      %p99 = scmp.eq.s32.totalorder %s21, 7
      %p100 = por %p98, %p99
      %p102 = scmp.ne.s32.totalorder %s87, %s101
      %p103 = scmp.eq.s32.totalorder %s21, 0
      %p104 = por %p102, %p103
      %s106 = sadd.s32 %s105, 1
      %p109 = scmp.eq.s32.totalorder %s15, 7
      %p110 = scmp.ne.s32.totalorder %s105, %s107
      %p111 = scmp.eq.s32.totalorder %s15, 0
      %p112 = por %p110, %p111
      %p113 = scmp.ne.s32.totalorder %s105, %s107
      %p114 = scmp.eq.s32.totalorder %s20, 7
      %p115 = por %p113, %p114
      %p116 = scmp.ne.s32.totalorder %s107, %s108
      %p117 = scmp.eq.s32.totalorder %s20, 0
      %p118 = por %p116, %p117
      %p119 = scmp.ne.s32.totalorder %s107, %s108
      %p120 = scmp.eq.s32.totalorder %s21, 7
      %p121 = por %p119, %p120
      %p123 = scmp.ne.s32.totalorder %s108, %s122
      %p124 = scmp.eq.s32.totalorder %s21, 0
      %p125 = por %p123, %p124
      %s127 = sadd.s32 %s126, 1
      %p130 = scmp.eq.s32.totalorder %s15, 7
      %p131 = scmp.ne.s32.totalorder %s126, %s128
      %p132 = scmp.eq.s32.totalorder %s15, 0
      %p133 = por %p131, %p132
      %p134 = scmp.ne.s32.totalorder %s126, %s128
      %p135 = scmp.eq.s32.totalorder %s20, 7
      %p136 = por %p134, %p135
      %p137 = scmp.ne.s32.totalorder %s128, %s129
      %p138 = scmp.eq.s32.totalorder %s20, 0
      %p139 = por %p137, %p138
      %p140 = scmp.ne.s32.totalorder %s128, %s129
      %p141 = scmp.eq.s32.totalorder %s21, 7
      %p142 = por %p140, %p141
      %p144 = scmp.ne.s32.totalorder %s129, %s143
      %p145 = scmp.eq.s32.totalorder %s21, 0
      %p146 = por %p144, %p145
      %s147 = ssub.s32 %s22, %s34
      %s148 = ssub.s32 %s23, %s30
      %s149 = sor.u32 %s147, %s148
      %p150 = scmp.eq.s32.totalorder %s149, 0
      %s152 = sadd.s32 %s151, 1
      %s153 = scalar_select %p150, %s151, %s152
      %p156 = pneg %p150
      %p157 = scmp.eq.s32.totalorder %s15, 7
      %p158 = por %p156, %p157
      %p159 = scmp.ne.s32.totalorder %s151, %s154
      %p160 = scmp.eq.s32.totalorder %s15, 0
      %p161 = por %p159, %p160
      %p162 = scmp.ne.s32.totalorder %s151, %s154
      %p163 = scmp.eq.s32.totalorder %s20, 7
      %p164 = por %p162, %p163
      %p165 = scmp.ne.s32.totalorder %s154, %s155
      %p166 = scmp.eq.s32.totalorder %s20, 0
      %p167 = por %p165, %p166
      %p168 = scmp.ne.s32.totalorder %s154, %s155
      %p169 = scmp.eq.s32.totalorder %s21, 7
      %p170 = por %p168, %p169
      %p172 = scmp.ne.s32.totalorder %s155, %s171
      %p173 = scmp.eq.s32.totalorder %s21, 0
      %p174 = por %p172, %p173
      %p175 = scmp.le.s32.totalorder 1, %s15
      %p176 = scmp.lt.s32.totalorder %s15, 9
      %p177 = pnand %p175, %p176
      %p178 = pneg %p177
      // Predicated region
      $region9: #{tpu_custom_call.1} parent=5 // pred_check
        _
      $region10: #{tpu_custom_call.1} parent=5 // pred_check_branch
        %180 = sbr.rel (%p177) target = $region12
      $region11: #{tpu_custom_call.1} parent=5 // pred_region
        %s181 = ssub.s32 %s15, 1
        // Predicated region
        $region13: #{tpu_custom_call.1} parent=11 // pred_check
          %p182 = pneg %p76
        $region14: #{tpu_custom_call.1} parent=11 // pred_check_branch
          %184 = sbr.rel (%p182) target = $region16
        $region15: #{tpu_custom_call.1} parent=11 // pred_region
          _
        $region16: #{tpu_custom_call.1} parent=11 // pred_fallthru
          _
        // Predicated region
        $region17: #{tpu_custom_call.1} parent=11 // pred_check
          %p185 = pneg %p97
        $region18: #{tpu_custom_call.1} parent=11 // pred_check_branch
          %187 = sbr.rel (%p185) target = $region20
        $region19: #{tpu_custom_call.1} parent=11 // pred_region
          _
        $region20: #{tpu_custom_call.1} parent=11 // pred_fallthru
          _
        // Predicated region
        $region21: #{tpu_custom_call.1} parent=11 // pred_check
          %p188 = pneg %p118
        $region22: #{tpu_custom_call.1} parent=11 // pred_check_branch
          %190 = sbr.rel (%p188) target = $region24
        $region23: #{tpu_custom_call.1} parent=11 // pred_region
          %192 = vsyncadd [#allocation4], 0
          %s193 = sshll.u32 %s3, 4
          %s194 = int_to_ptr.hbm [resolvable:$true] %s193
          %s195 = sshll.u32 [#allocation3], 4
          %s196 = int_to_ptr.vmem [resolvable:$true] %s195
          %201 = dma.hbm_to_vmem [thread:$0]  %s194, 1024, %s196, [#allocation4], 128, 128, 8
        $region24: #{tpu_custom_call.1} parent=11 // pred_fallthru
          _
        // Predicated region
        $region25: #{tpu_custom_call.1} parent=11 // pred_check
          %p202 = pneg %p139
        $region26: #{tpu_custom_call.1} parent=11 // pred_check_branch
          %204 = sbr.rel (%p202) target = $region28
        $region27: #{tpu_custom_call.1} parent=11 // pred_region
          _
        $region28: #{tpu_custom_call.1} parent=11 // pred_fallthru
          _
      $region12: #{tpu_custom_call.1} parent=5 // pred_fallthru
        _
      %p205 = scmp.lt.s32.totalorder %s15, 8
      // Predicated region
      $region29: #{tpu_custom_call.1} parent=5 // pred_check
        %p206 = pneg %p205
      $region30: #{tpu_custom_call.1} parent=5 // pred_check_branch
        %208 = sbr.rel (%p206) target = $region32
      $region31: #{tpu_custom_call.1} parent=5 // pred_region
        // Predicated region
        $region33: #{tpu_custom_call.1} parent=31 // pred_check
          %p209 = pneg %p49
        $region34: #{tpu_custom_call.1} parent=31 // pred_check_branch
          %211 = sbr.rel (%p209) target = $region36
        $region35: #{tpu_custom_call.1} parent=31 // pred_region
          %p212 = scmp.lt.s32.totalorder %s22, 1
          %s213 = scalar_select %p212, %s22, 1
          %p214 = scmp.lt.s32.totalorder %s23, 3
          %s215 = scalar_select %p214, %s23, 3
          %s216 = smul.addr %s213, 4
          %s217 = sadd.s32 %s215, %s216
          %s218 = smul.addr %s217, 8
          %s219 = scalar_lea.vmem %s0, %s218
        $region36: #{tpu_custom_call.1} parent=31 // pred_fallthru
          _
      $region32: #{tpu_custom_call.1} parent=5 // pred_fallthru
        _
      %p220 = scmp.le.s32.totalorder 1, %s15
      %p221 = scmp.lt.s32.totalorder %s15, 9
      %p222 = pnand %p220, %p221
      %p223 = pneg %p222
      // Predicated region
      $region37: #{tpu_custom_call.1} parent=5 // pred_check
        _
      $region38: #{tpu_custom_call.1} parent=5 // pred_check_branch
        %225 = sbr.rel (%p222) target = $region40
      $region39: #{tpu_custom_call.1} parent=5 // pred_region
        %s226 = ssub.s32 %s15, 1
        // Predicated region
        $region41: #{tpu_custom_call.1} parent=39 // pred_check
          %p227 = pneg %p118
        $region42: #{tpu_custom_call.1} parent=39 // pred_check_branch
          %229 = sbr.rel (%p227) target = $region44
        $region43: #{tpu_custom_call.1} parent=39 // pred_region
          %231 = dma.done [#allocation4], 1024
        $region44: #{tpu_custom_call.1} parent=39 // pred_fallthru
          _
        %p232 = scmp.lt.s32.totalorder %s24, 1
        %s233 = scalar_select %p232, %s24, 1
        %p234 = scmp.lt.s32.totalorder %s25, 3
        %s235 = scalar_select %p234, %s25, 3
        %s236 = smul.addr %s233, 4
        %s237 = sadd.s32 %s235, %s236
        %s238 = smul.addr %s237, 8
        %s239 = scalar_lea.vmem %s0, %s238
        %p240 = pneg %p55
        %p241 = pneg %p52
        %p242 = pneg %p76
        %p243 = pneg %p73
        %p244 = pneg %p97
        %p245 = pneg %p94
        %p246 = pneg %p118
        %p247 = pneg %p115
        %p248 = pneg %p139
        %p249 = pneg %p136
        %p250 = pneg %p167
        %p251 = pneg %p164
        %s252 = sand.u32 %s154, 1
        %s253 = scalar_lea.sflag [#allocation5], %s252
        %s254 = sand.u32 %s154, 1
        %s255 = smul.addr %s254, 8
        %s256 = scalar_lea.vmem [#allocation6], %s255
        %p257 = scmp.lt.s32.totalorder %s24, 1
        %s258 = scalar_select %p257, %s24, 1
        %p259 = scmp.lt.s32.totalorder %s25, 3
        %s260 = scalar_select %p259, %s25, 3
        %s261 = smul.addr %s258, 4
        %s262 = sadd.s32 %s260, %s261
        %s263 = smul.addr %s262, 8
        %s264 = scalar_lea.vmem %s0, %s263
        %v265 = vld [vmem:[%s264] sm:$0xff]
        %v266 = vld [vmem:[%s1] sm:$0xff]
        %v267 = vld [vmem:[%s1 + $0x8] sm:$0xff]
        %v268 = vld [vmem:[%s1 + $0x10] sm:$0xff]
        %v269 = vld [vmem:[%s1 + $0x18] sm:$0xff]
        %v270 = vld [vmem:[%s1 + $0x20] sm:$0xff]
        %v271 = vld [vmem:[%s1 + $0x28] sm:$0xff]
        %v272 = vld [vmem:[%s1 + $0x30] sm:$0xff]
        %v273 = vld [vmem:[%s1 + $0x38] sm:$0xff]
        %v274 = vld [vmem:[%s1 + $0x40] sm:$0xff]
        %v275 = vld [vmem:[%s1 + $0x48] sm:$0xff]
        %v276 = vld [vmem:[%s1 + $0x50] sm:$0xff]
        %v277 = vld [vmem:[%s1 + $0x58] sm:$0xff]
        %v278 = vld [vmem:[%s1 + $0x60] sm:$0xff]
        %v279 = vld [vmem:[%s1 + $0x68] sm:$0xff]
        %v280 = vld [vmem:[%s1 + $0x70] sm:$0xff]
        %v281 = vld [vmem:[%s1 + $0x78] sm:$0xff]
        %282 = vmatpush.msra.mxu0 %v281
        %283 = vmatpush.msra.mxu0 %v280
        %284 = vmatpush.msra.mxu0 %v279
        %285 = vmatpush.msra.mxu0 %v278
        %286 = vmatpush.msra.mxu0 %v277
        %287 = vmatpush.msra.mxu0 %v276
        %288 = vmatpush.msra.mxu0 %v275
        %289 = vmatpush.msra.mxu0 %v274
        %290 = vmatpush.msra.mxu0 %v273
        %291 = vmatpush.msra.mxu0 %v272
        %292 = vmatpush.msra.mxu0 %v271
        %293 = vmatpush.msra.mxu0 %v270
        %294 = vmatpush.msra.mxu0 %v269
        %295 = vmatpush.msra.mxu0 %v268
        %296 = vmatpush.msra.mxu0 %v267
        %297 = vmatpush.msra.mxu0 %v266
        %298 = vmatmul.f32.gmra.mxu0 %v265
        %v299 = vpop.f32.mrf.mxu0
        %v300 = vadd.f32 0.0, %v299
        %301 = vdwg.mxu0
        %v302 = vld [vmem:[%s2] sm:$0xff]
        %v303 = vld [vmem:[%s2 + $0x8] sm:$0xff]
        %v304 = vld [vmem:[%s2 + $0x10] sm:$0xff]
        %v305 = vld [vmem:[%s2 + $0x18] sm:$0xff]
        %v306 = vld [vmem:[%s2 + $0x20] sm:$0xff]
        %v307 = vld [vmem:[%s2 + $0x28] sm:$0xff]
        %v308 = vld [vmem:[%s2 + $0x30] sm:$0xff]
        %v309 = vld [vmem:[%s2 + $0x38] sm:$0xff]
        %v310 = vld [vmem:[%s2 + $0x40] sm:$0xff]
        %v311 = vld [vmem:[%s2 + $0x48] sm:$0xff]
        %v312 = vld [vmem:[%s2 + $0x50] sm:$0xff]
        %v313 = vld [vmem:[%s2 + $0x58] sm:$0xff]
        %v314 = vld [vmem:[%s2 + $0x60] sm:$0xff]
        %v315 = vld [vmem:[%s2 + $0x68] sm:$0xff]
        %v316 = vld [vmem:[%s2 + $0x70] sm:$0xff]
        %v317 = vld [vmem:[%s2 + $0x78] sm:$0xff]
        %vm318 = vcmask 523264
        %v320 = vsel %vm318, %v300, 0
        %322 = vmatpush.msra.mxu0 0.0
        %323 = vmatpush.msra.mxu0 0.0
        %324 = vmatpush.msra.mxu0 0.0
        %325 = vmatpush.msra.mxu0 0.0
        %326 = vmatpush.msra.mxu0 0.0
        %327 = vmatpush.msra.mxu0 0.0
        %328 = vmatpush.msra.mxu0 0.0
        %329 = vmatpush.msra.mxu0 0.0
        %330 = vmatpush.msra.mxu0 %v316
        %331 = vmatpush.msra.mxu0 %v314
        %332 = vmatpush.msra.mxu0 %v312
        %333 = vmatpush.msra.mxu0 %v310
        %334 = vmatpush.msra.mxu0 %v308
        %335 = vmatpush.msra.mxu0 %v306
        %336 = vmatpush.msra.mxu0 %v304
        %337 = vmatpush.msra.mxu0 %v302
        %338 = vmatmul.f32.gmra.mxu0 %v320
        %v339 = vpop.f32.mrf.mxu0
        %v340 = vadd.f32 0.0, %v339
        %341 = vdwg.mxu0
        %342 = vmatpush.msra.mxu0 0.0
        %343 = vmatpush.msra.mxu0 0.0
        %344 = vmatpush.msra.mxu0 0.0
        %345 = vmatpush.msra.mxu0 0.0
        %346 = vmatpush.msra.mxu0 0.0
        %347 = vmatpush.msra.mxu0 0.0
        %348 = vmatpush.msra.mxu0 0.0
        %349 = vmatpush.msra.mxu0 0.0
        %350 = vmatpush.msra.mxu0 %v317
        %351 = vmatpush.msra.mxu0 %v315
        %352 = vmatpush.msra.mxu0 %v313
        %353 = vmatpush.msra.mxu0 %v311
        %354 = vmatpush.msra.mxu0 %v309
        %355 = vmatpush.msra.mxu0 %v307
        %356 = vmatpush.msra.mxu0 %v305
        %357 = vmatpush.msra.mxu0 %v303
        %358 = vmatmul.f32.gmra.mxu0 %v320
        %v359 = vpop.f32.mrf.mxu0
        %v360 = vadd.f32 0.0, %v359
        %361 = vdwg.mxu0
        %363 = vrot.lane.b32.xlu0 %v340, 120
        %v364 = vpop.permute.xlu0 %363
        %365 = vrot.lane.b32.xlu0 %v340, 112
        %v366 = vpop.permute.xlu0 %365
        %367 = vrot.lane.b32.xlu0 %v340, 104
        %v368 = vpop.permute.xlu0 %367
        %369 = vrot.lane.b32.xlu0 %v340, 96
        %v370 = vpop.permute.xlu0 %369
        %371 = vrot.lane.b32.xlu0 %v340, 88
        %v372 = vpop.permute.xlu0 %371
        %373 = vrot.lane.b32.xlu0 %v340, 80
        %v374 = vpop.permute.xlu0 %373
        %375 = vrot.lane.b32.xlu0 %v340, 72
        %v376 = vpop.permute.xlu0 %375
        %378 = vrot.lane.b32.xlu0 %v360, 120
        %v379 = vpop.permute.xlu0 %378
        %381 = vrot.lane.b32.xlu0 %v360, 112
        %v382 = vpop.permute.xlu0 %381
        %384 = vrot.lane.b32.xlu0 %v360, 104
        %v385 = vpop.permute.xlu0 %384
        %387 = vrot.lane.b32.xlu0 %v360, 96
        %v388 = vpop.permute.xlu0 %387
        %390 = vrot.lane.b32.xlu0 %v360, 88
        %v391 = vpop.permute.xlu0 %390
        %393 = vrot.lane.b32.xlu0 %v360, 80
        %v394 = vpop.permute.xlu0 %393
        %396 = vrot.lane.b32.xlu0 %v360, 72
        %v397 = vpop.permute.xlu0 %396
        %399 = vrot.lane.b32.xlu0 %v340, 64
        %v400 = vpop.permute.xlu0 %399
        %vm401 = vcmask 64512
        %v402 = vsel %vm401, %v340, 0
        %v404 = vsel %vm401, %v400, 0
        %406 = vmatpush.xpose.msra.mxu0 0.0
        %407 = vmatpush.xpose.msra.mxu0 0.0
        %408 = vmatpush.xpose.msra.mxu0 0.0
        %409 = vmatpush.xpose.msra.mxu0 0.0
        %410 = vmatpush.xpose.msra.mxu0 0.0
        %411 = vmatpush.xpose.msra.mxu0 0.0
        %412 = vmatpush.xpose.msra.mxu0 0.0
        %413 = vmatpush.xpose.msra.mxu0 0.0
        %414 = vmatpush.xpose.msra.mxu0 0.0
        %415 = vmatpush.xpose.msra.mxu0 0.0
        %416 = vmatpush.xpose.msra.mxu0 0.0
        %417 = vmatpush.xpose.msra.mxu0 0.0
        %418 = vmatpush.xpose.msra.mxu0 0.0
        %419 = vmatpush.xpose.msra.mxu0 0.0
        %420 = vmatpush.xpose.msra.mxu0 0.0
        %421 = vmatpush.xpose.msra.mxu0 %v404
        %422 = vmatmul.f32.gmra.mxu0 %v402
        %v423 = vpop.f32.mrf.mxu0
        %v424 = vadd.f32 0.0, %v423
        %425 = vdwg.mxu0
        %426 = vrot.lane.b32.xlu0 %v364, 64
        %v427 = vpop.permute.xlu0 %426
        %v428 = vsel %vm401, %v364, 0
        %v430 = vsel %vm401, %v427, 0
        %432 = vmatpush.xpose.msra.mxu0 0.0
        %433 = vmatpush.xpose.msra.mxu0 0.0
        %434 = vmatpush.xpose.msra.mxu0 0.0
        %435 = vmatpush.xpose.msra.mxu0 0.0
        %436 = vmatpush.xpose.msra.mxu0 0.0
        %437 = vmatpush.xpose.msra.mxu0 0.0
        %438 = vmatpush.xpose.msra.mxu0 0.0
        %439 = vmatpush.xpose.msra.mxu0 0.0
        %440 = vmatpush.xpose.msra.mxu0 0.0
        %441 = vmatpush.xpose.msra.mxu0 0.0
        %442 = vmatpush.xpose.msra.mxu0 0.0
        %443 = vmatpush.xpose.msra.mxu0 0.0
        %444 = vmatpush.xpose.msra.mxu0 0.0
        %445 = vmatpush.xpose.msra.mxu0 0.0
        %446 = vmatpush.xpose.msra.mxu0 0.0
        %447 = vmatpush.xpose.msra.mxu0 %v430
        %448 = vmatmul.f32.gmra.mxu0 %v428
        %v449 = vpop.f32.mrf.mxu0
        %v450 = vadd.f32 0.0, %v449
        %451 = vdwg.mxu0
        %452 = vrot.lane.b32.xlu0 %v366, 64
        %v453 = vpop.permute.xlu0 %452
        %v454 = vsel %vm401, %v366, 0
        %v456 = vsel %vm401, %v453, 0
        %458 = vmatpush.xpose.msra.mxu0 0.0
        %459 = vmatpush.xpose.msra.mxu0 0.0
        %460 = vmatpush.xpose.msra.mxu0 0.0
        %461 = vmatpush.xpose.msra.mxu0 0.0
        %462 = vmatpush.xpose.msra.mxu0 0.0
        %463 = vmatpush.xpose.msra.mxu0 0.0
        %464 = vmatpush.xpose.msra.mxu0 0.0
        %465 = vmatpush.xpose.msra.mxu0 0.0
        %466 = vmatpush.xpose.msra.mxu0 0.0
        %467 = vmatpush.xpose.msra.mxu0 0.0
        %468 = vmatpush.xpose.msra.mxu0 0.0
        %469 = vmatpush.xpose.msra.mxu0 0.0
        %470 = vmatpush.xpose.msra.mxu0 0.0
        %471 = vmatpush.xpose.msra.mxu0 0.0
        %472 = vmatpush.xpose.msra.mxu0 0.0
        %473 = vmatpush.xpose.msra.mxu0 %v456
        %474 = vmatmul.f32.gmra.mxu0 %v454
        %v475 = vpop.f32.mrf.mxu0
        %v476 = vadd.f32 0.0, %v475
        %477 = vdwg.mxu0
        %478 = vrot.lane.b32.xlu0 %v368, 64
        %v479 = vpop.permute.xlu0 %478
        %v480 = vsel %vm401, %v368, 0
        %v482 = vsel %vm401, %v479, 0
        %484 = vmatpush.xpose.msra.mxu0 0.0
        %485 = vmatpush.xpose.msra.mxu0 0.0
        %486 = vmatpush.xpose.msra.mxu0 0.0
        %487 = vmatpush.xpose.msra.mxu0 0.0
        %488 = vmatpush.xpose.msra.mxu0 0.0
        %489 = vmatpush.xpose.msra.mxu0 0.0
        %490 = vmatpush.xpose.msra.mxu0 0.0
        %491 = vmatpush.xpose.msra.mxu0 0.0
        %492 = vmatpush.xpose.msra.mxu0 0.0
        %493 = vmatpush.xpose.msra.mxu0 0.0
        %494 = vmatpush.xpose.msra.mxu0 0.0
        %495 = vmatpush.xpose.msra.mxu0 0.0
        %496 = vmatpush.xpose.msra.mxu0 0.0
        %497 = vmatpush.xpose.msra.mxu0 0.0
        %498 = vmatpush.xpose.msra.mxu0 0.0
        %499 = vmatpush.xpose.msra.mxu0 %v482
        %500 = vmatmul.f32.gmra.mxu0 %v480
        %v501 = vpop.f32.mrf.mxu0
        %v502 = vadd.f32 0.0, %v501
        %503 = vdwg.mxu0
        %504 = vrot.lane.b32.xlu0 %v370, 64
        %v505 = vpop.permute.xlu0 %504
        %v506 = vsel %vm401, %v370, 0
        %v508 = vsel %vm401, %v505, 0
        %510 = vmatpush.xpose.msra.mxu0 0.0
        %511 = vmatpush.xpose.msra.mxu0 0.0
        %512 = vmatpush.xpose.msra.mxu0 0.0
        %513 = vmatpush.xpose.msra.mxu0 0.0
        %514 = vmatpush.xpose.msra.mxu0 0.0
        %515 = vmatpush.xpose.msra.mxu0 0.0
        %516 = vmatpush.xpose.msra.mxu0 0.0
        %517 = vmatpush.xpose.msra.mxu0 0.0
        %518 = vmatpush.xpose.msra.mxu0 0.0
        %519 = vmatpush.xpose.msra.mxu0 0.0
        %520 = vmatpush.xpose.msra.mxu0 0.0
        %521 = vmatpush.xpose.msra.mxu0 0.0
        %522 = vmatpush.xpose.msra.mxu0 0.0
        %523 = vmatpush.xpose.msra.mxu0 0.0
        %524 = vmatpush.xpose.msra.mxu0 0.0
        %525 = vmatpush.xpose.msra.mxu0 %v508
        %526 = vmatmul.f32.gmra.mxu0 %v506
        %v527 = vpop.f32.mrf.mxu0
        %v528 = vadd.f32 0.0, %v527
        %529 = vdwg.mxu0
        %530 = vrot.lane.b32.xlu0 %v372, 64
        %v531 = vpop.permute.xlu0 %530
        %v532 = vsel %vm401, %v372, 0
        %v534 = vsel %vm401, %v531, 0
        %536 = vmatpush.xpose.msra.mxu0 0.0
        %537 = vmatpush.xpose.msra.mxu0 0.0
        %538 = vmatpush.xpose.msra.mxu0 0.0
        %539 = vmatpush.xpose.msra.mxu0 0.0
        %540 = vmatpush.xpose.msra.mxu0 0.0
        %541 = vmatpush.xpose.msra.mxu0 0.0
        %542 = vmatpush.xpose.msra.mxu0 0.0
        %543 = vmatpush.xpose.msra.mxu0 0.0
        %544 = vmatpush.xpose.msra.mxu0 0.0
        %545 = vmatpush.xpose.msra.mxu0 0.0
        %546 = vmatpush.xpose.msra.mxu0 0.0
        %547 = vmatpush.xpose.msra.mxu0 0.0
        %548 = vmatpush.xpose.msra.mxu0 0.0
        %549 = vmatpush.xpose.msra.mxu0 0.0
        %550 = vmatpush.xpose.msra.mxu0 0.0
        %551 = vmatpush.xpose.msra.mxu0 %v534
        %552 = vmatmul.f32.gmra.mxu0 %v532
        %v553 = vpop.f32.mrf.mxu0
        %v554 = vadd.f32 0.0, %v553
        %555 = vdwg.mxu0
        %556 = vrot.lane.b32.xlu0 %v374, 64
        %v557 = vpop.permute.xlu0 %556
        %v558 = vsel %vm401, %v374, 0
        %v560 = vsel %vm401, %v557, 0
        %562 = vmatpush.xpose.msra.mxu0 0.0
        %563 = vmatpush.xpose.msra.mxu0 0.0
        %564 = vmatpush.xpose.msra.mxu0 0.0
        %565 = vmatpush.xpose.msra.mxu0 0.0
        %566 = vmatpush.xpose.msra.mxu0 0.0
        %567 = vmatpush.xpose.msra.mxu0 0.0
        %568 = vmatpush.xpose.msra.mxu0 0.0
        %569 = vmatpush.xpose.msra.mxu0 0.0
        %570 = vmatpush.xpose.msra.mxu0 0.0
        %571 = vmatpush.xpose.msra.mxu0 0.0
        %572 = vmatpush.xpose.msra.mxu0 0.0
        %573 = vmatpush.xpose.msra.mxu0 0.0
        %574 = vmatpush.xpose.msra.mxu0 0.0
        %575 = vmatpush.xpose.msra.mxu0 0.0
        %576 = vmatpush.xpose.msra.mxu0 0.0
        %577 = vmatpush.xpose.msra.mxu0 %v560
        %578 = vmatmul.f32.gmra.mxu0 %v558
        %v579 = vpop.f32.mrf.mxu0
        %v580 = vadd.f32 0.0, %v579
        %581 = vdwg.mxu0
        %582 = vrot.lane.b32.xlu0 %v376, 64
        %v583 = vpop.permute.xlu0 %582
        %v584 = vsel %vm401, %v376, 0
        %v586 = vsel %vm401, %v583, 0
        %588 = vmatpush.xpose.msra.mxu0 0.0
        %589 = vmatpush.xpose.msra.mxu0 0.0
        %590 = vmatpush.xpose.msra.mxu0 0.0
        %591 = vmatpush.xpose.msra.mxu0 0.0
        %592 = vmatpush.xpose.msra.mxu0 0.0
        %593 = vmatpush.xpose.msra.mxu0 0.0
        %594 = vmatpush.xpose.msra.mxu0 0.0
        %595 = vmatpush.xpose.msra.mxu0 0.0
        %596 = vmatpush.xpose.msra.mxu0 0.0
        %597 = vmatpush.xpose.msra.mxu0 0.0
        %598 = vmatpush.xpose.msra.mxu0 0.0
        %599 = vmatpush.xpose.msra.mxu0 0.0
        %600 = vmatpush.xpose.msra.mxu0 0.0
        %601 = vmatpush.xpose.msra.mxu0 0.0
        %602 = vmatpush.xpose.msra.mxu0 0.0
        %603 = vmatpush.xpose.msra.mxu0 %v586
        %604 = vmatmul.f32.gmra.mxu0 %v584
        %v605 = vpop.f32.mrf.mxu0
        %v606 = vadd.f32 0.0, %v605
        %607 = vdwg.mxu0
        %v608 = vsel %vm401, %v424, -inf
        %609 = vmax.xlane.f32.xlu0 %v608
        %v610 = vpop.xlane.xlu0 %609
        %v611 = vsel %vm401, %v450, -inf
        %612 = vmax.xlane.f32.xlu0 %v611
        %v613 = vpop.xlane.xlu0 %612
        %v614 = vsel %vm401, %v476, -inf
        %615 = vmax.xlane.f32.xlu0 %v614
        %v616 = vpop.xlane.xlu0 %615
        %v617 = vsel %vm401, %v502, -inf
        %618 = vmax.xlane.f32.xlu0 %v617
        %v619 = vpop.xlane.xlu0 %618
        %v620 = vsel %vm401, %v528, -inf
        %621 = vmax.xlane.f32.xlu0 %v620
        %v622 = vpop.xlane.xlu0 %621
        %v623 = vsel %vm401, %v554, -inf
        %624 = vmax.xlane.f32.xlu0 %v623
        %v625 = vpop.xlane.xlu0 %624
        %v626 = vsel %vm401, %v580, -inf
        %627 = vmax.xlane.f32.xlu0 %v626
        %v628 = vpop.xlane.xlu0 %627
        %v629 = vsel %vm401, %v606, -inf
        %630 = vmax.xlane.f32.xlu0 %v629
        %v631 = vpop.xlane.xlu0 %630
        %v632 = vsub.f32 %v424, %v610
        %v633 = vsub.f32 %v450, %v613
        %v634 = vsub.f32 %v476, %v616
        %v635 = vsub.f32 %v502, %v619
        %v636 = vsub.f32 %v528, %v622
        %v637 = vsub.f32 %v554, %v625
        %v638 = vsub.f32 %v580, %v628
        %v639 = vsub.f32 %v606, %v631
        %v640 = vmul.f32 %v632, 1.442695
        %v641 = vpow.pop %v640
        %v642 = vmul.f32 %v633, 1.442695
        %v643 = vpow.pop %v642
        %v644 = vmul.f32 %v634, 1.442695
        %v645 = vpow.pop %v644
        %v646 = vmul.f32 %v635, 1.442695
        %v647 = vpow.pop %v646
        %v648 = vmul.f32 %v636, 1.442695
        %v649 = vpow.pop %v648
        %v650 = vmul.f32 %v637, 1.442695
        %v651 = vpow.pop %v650
        %v652 = vmul.f32 %v638, 1.442695
        %v653 = vpow.pop %v652
        %v654 = vmul.f32 %v639, 1.442695
        %v655 = vpow.pop %v654
        %v656 = vsel %vm401, %v641, 0.0
        %657 = vadd.xlane.f32.xlu0 %v656
        %v658 = vpop.xlane.xlu0 %657
        %v659 = vsel %vm401, %v643, 0.0
        %660 = vadd.xlane.f32.xlu0 %v659
        %v661 = vpop.xlane.xlu0 %660
        %v662 = vsel %vm401, %v645, 0.0
        %663 = vadd.xlane.f32.xlu0 %v662
        %v664 = vpop.xlane.xlu0 %663
        %v665 = vsel %vm401, %v647, 0.0
        %666 = vadd.xlane.f32.xlu0 %v665
        %v667 = vpop.xlane.xlu0 %666
        %v668 = vsel %vm401, %v649, 0.0
        %669 = vadd.xlane.f32.xlu0 %v668
        %v670 = vpop.xlane.xlu0 %669
        %v671 = vsel %vm401, %v651, 0.0
        %672 = vadd.xlane.f32.xlu0 %v671
        %v673 = vpop.xlane.xlu0 %672
        %v674 = vsel %vm401, %v653, 0.0
        %675 = vadd.xlane.f32.xlu0 %v674
        %v676 = vpop.xlane.xlu0 %675
        %v677 = vsel %vm401, %v655, 0.0
        %678 = vadd.xlane.f32.xlu0 %v677
        %v679 = vpop.xlane.xlu0 %678
        %v680 = vrcp.pop %v658
        %v681 = vrcp.pop %v661
        %v682 = vrcp.pop %v664
        %v683 = vrcp.pop %v667
        %v684 = vrcp.pop %v670
        %v685 = vrcp.pop %v673
        %v686 = vrcp.pop %v676
        %v687 = vrcp.pop %v679
        %v688 = vmul.f32 %v641, %v680
        %v689 = vmul.f32 %v643, %v681
        %v690 = vmul.f32 %v645, %v682
        %v691 = vmul.f32 %v647, %v683
        %v692 = vmul.f32 %v649, %v684
        %v693 = vmul.f32 %v651, %v685
        %v694 = vmul.f32 %v653, %v686
        %v695 = vmul.f32 %v655, %v687
        %v697 = vsel %vm401, %v688, 0
        %699 = vmatpush.msra.mxu0 0.0
        %700 = vmatpush.msra.mxu0 0.0
        %701 = vmatpush.msra.mxu0 0.0
        %702 = vmatpush.msra.mxu0 0.0
        %703 = vmatpush.msra.mxu0 0.0
        %704 = vmatpush.msra.mxu0 0.0
        %705 = vmatpush.msra.mxu0 0.0
        %706 = vmatpush.msra.mxu0 0.0
        %707 = vmatpush.msra.mxu0 0.0
        %708 = vmatpush.msra.mxu0 0.0
        %709 = vmatpush.msra.mxu0 0.0
        %710 = vmatpush.msra.mxu0 0.0
        %711 = vmatpush.msra.mxu0 0.0
        %712 = vmatpush.msra.mxu0 0.0
        %713 = vmatpush.msra.mxu0 0.0
        %714 = vmatpush.msra.mxu0 %v360
        %715 = vmatmul.f32.gmra.mxu0 %v697
        %v716 = vpop.f32.mrf.mxu0
        %v717 = vadd.f32 0.0, %v716
        %718 = vdwg.mxu0
        %v720 = vsel %vm401, %v689, 0
        %722 = vmatpush.msra.mxu0 0.0
        %723 = vmatpush.msra.mxu0 0.0
        %724 = vmatpush.msra.mxu0 0.0
        %725 = vmatpush.msra.mxu0 0.0
        %726 = vmatpush.msra.mxu0 0.0
        %727 = vmatpush.msra.mxu0 0.0
        %728 = vmatpush.msra.mxu0 0.0
        %729 = vmatpush.msra.mxu0 0.0
        %730 = vmatpush.msra.mxu0 0.0
        %731 = vmatpush.msra.mxu0 0.0
        %732 = vmatpush.msra.mxu0 0.0
        %733 = vmatpush.msra.mxu0 0.0
        %734 = vmatpush.msra.mxu0 0.0
        %735 = vmatpush.msra.mxu0 0.0
        %736 = vmatpush.msra.mxu0 0.0
        %737 = vmatpush.msra.mxu0 %v379
        %738 = vmatmul.f32.gmra.mxu0 %v720
        %v739 = vpop.f32.mrf.mxu0
        %v740 = vadd.f32 0.0, %v739
        %741 = vdwg.mxu0
        %v743 = vsel %vm401, %v690, 0
        %745 = vmatpush.msra.mxu0 0.0
        %746 = vmatpush.msra.mxu0 0.0
        %747 = vmatpush.msra.mxu0 0.0
        %748 = vmatpush.msra.mxu0 0.0
        %749 = vmatpush.msra.mxu0 0.0
        %750 = vmatpush.msra.mxu0 0.0
        %751 = vmatpush.msra.mxu0 0.0
        %752 = vmatpush.msra.mxu0 0.0
        %753 = vmatpush.msra.mxu0 0.0
        %754 = vmatpush.msra.mxu0 0.0
        %755 = vmatpush.msra.mxu0 0.0
        %756 = vmatpush.msra.mxu0 0.0
        %757 = vmatpush.msra.mxu0 0.0
        %758 = vmatpush.msra.mxu0 0.0
        %759 = vmatpush.msra.mxu0 0.0
        %760 = vmatpush.msra.mxu0 %v382
        %761 = vmatmul.f32.gmra.mxu0 %v743
        %v762 = vpop.f32.mrf.mxu0
        %v763 = vadd.f32 0.0, %v762
        %764 = vdwg.mxu0
        %v766 = vsel %vm401, %v691, 0
        %768 = vmatpush.msra.mxu0 0.0
        %769 = vmatpush.msra.mxu0 0.0
        %770 = vmatpush.msra.mxu0 0.0
        %771 = vmatpush.msra.mxu0 0.0
        %772 = vmatpush.msra.mxu0 0.0
        %773 = vmatpush.msra.mxu0 0.0
        %774 = vmatpush.msra.mxu0 0.0
        %775 = vmatpush.msra.mxu0 0.0
        %776 = vmatpush.msra.mxu0 0.0
        %777 = vmatpush.msra.mxu0 0.0
        %778 = vmatpush.msra.mxu0 0.0
        %779 = vmatpush.msra.mxu0 0.0
        %780 = vmatpush.msra.mxu0 0.0
        %781 = vmatpush.msra.mxu0 0.0
        %782 = vmatpush.msra.mxu0 0.0
        %783 = vmatpush.msra.mxu0 %v385
        %784 = vmatmul.f32.gmra.mxu0 %v766
        %v785 = vpop.f32.mrf.mxu0
        %v786 = vadd.f32 0.0, %v785
        %787 = vdwg.mxu0
        %v789 = vsel %vm401, %v692, 0
        %791 = vmatpush.msra.mxu0 0.0
        %792 = vmatpush.msra.mxu0 0.0
        %793 = vmatpush.msra.mxu0 0.0
        %794 = vmatpush.msra.mxu0 0.0
        %795 = vmatpush.msra.mxu0 0.0
        %796 = vmatpush.msra.mxu0 0.0
        %797 = vmatpush.msra.mxu0 0.0
        %798 = vmatpush.msra.mxu0 0.0
        %799 = vmatpush.msra.mxu0 0.0
        %800 = vmatpush.msra.mxu0 0.0
        %801 = vmatpush.msra.mxu0 0.0
        %802 = vmatpush.msra.mxu0 0.0
        %803 = vmatpush.msra.mxu0 0.0
        %804 = vmatpush.msra.mxu0 0.0
        %805 = vmatpush.msra.mxu0 0.0
        %806 = vmatpush.msra.mxu0 %v388
        %807 = vmatmul.f32.gmra.mxu0 %v789
        %v808 = vpop.f32.mrf.mxu0
        %v809 = vadd.f32 0.0, %v808
        %810 = vdwg.mxu0
        %v812 = vsel %vm401, %v693, 0
        %814 = vmatpush.msra.mxu0 0.0
        %815 = vmatpush.msra.mxu0 0.0
        %816 = vmatpush.msra.mxu0 0.0
        %817 = vmatpush.msra.mxu0 0.0
        %818 = vmatpush.msra.mxu0 0.0
        %819 = vmatpush.msra.mxu0 0.0
        %820 = vmatpush.msra.mxu0 0.0
        %821 = vmatpush.msra.mxu0 0.0
        %822 = vmatpush.msra.mxu0 0.0
        %823 = vmatpush.msra.mxu0 0.0
        %824 = vmatpush.msra.mxu0 0.0
        %825 = vmatpush.msra.mxu0 0.0
        %826 = vmatpush.msra.mxu0 0.0
        %827 = vmatpush.msra.mxu0 0.0
        %828 = vmatpush.msra.mxu0 0.0
        %829 = vmatpush.msra.mxu0 %v391
        %830 = vmatmul.f32.gmra.mxu0 %v812
        %v831 = vpop.f32.mrf.mxu0
        %v832 = vadd.f32 0.0, %v831
        %833 = vdwg.mxu0
        %v835 = vsel %vm401, %v694, 0
        %837 = vmatpush.msra.mxu0 0.0
        %838 = vmatpush.msra.mxu0 0.0
        %839 = vmatpush.msra.mxu0 0.0
        %840 = vmatpush.msra.mxu0 0.0
        %841 = vmatpush.msra.mxu0 0.0
        %842 = vmatpush.msra.mxu0 0.0
        %843 = vmatpush.msra.mxu0 0.0
        %844 = vmatpush.msra.mxu0 0.0
        %845 = vmatpush.msra.mxu0 0.0
        %846 = vmatpush.msra.mxu0 0.0
        %847 = vmatpush.msra.mxu0 0.0
        %848 = vmatpush.msra.mxu0 0.0
        %849 = vmatpush.msra.mxu0 0.0
        %850 = vmatpush.msra.mxu0 0.0
        %851 = vmatpush.msra.mxu0 0.0
        %852 = vmatpush.msra.mxu0 %v394
        %853 = vmatmul.f32.gmra.mxu0 %v835
        %v854 = vpop.f32.mrf.mxu0
        %v855 = vadd.f32 0.0, %v854
        %856 = vdwg.mxu0
        %v858 = vsel %vm401, %v695, 0
        %860 = vmatpush.msra.mxu0 0.0
        %861 = vmatpush.msra.mxu0 0.0
        %862 = vmatpush.msra.mxu0 0.0
        %863 = vmatpush.msra.mxu0 0.0
        %864 = vmatpush.msra.mxu0 0.0
        %865 = vmatpush.msra.mxu0 0.0
        %866 = vmatpush.msra.mxu0 0.0
        %867 = vmatpush.msra.mxu0 0.0
        %868 = vmatpush.msra.mxu0 0.0
        %869 = vmatpush.msra.mxu0 0.0
        %870 = vmatpush.msra.mxu0 0.0
        %871 = vmatpush.msra.mxu0 0.0
        %872 = vmatpush.msra.mxu0 0.0
        %873 = vmatpush.msra.mxu0 0.0
        %874 = vmatpush.msra.mxu0 0.0
        %875 = vmatpush.msra.mxu0 %v397
        %876 = vmatmul.f32.gmra.mxu0 %v858
        %v877 = vpop.f32.mrf.mxu0
        %v878 = vadd.f32 0.0, %v877
        %879 = vdwg.mxu0
        %880 = vst.msk [vmem:[#allocation2] sm:$0xff] %vm401, %v717
        %882 = vrot.lane.b32.xlu0 %v740, 8
        %v883 = vpop.permute.xlu0 %882
        %vm885 = vcmask 130112
        %886 = vst.msk [vmem:[#allocation2] sm:$0xff] %vm885, %v883
        %888 = vrot.lane.b32.xlu0 %v763, 16
        %v889 = vpop.permute.xlu0 %888
        %vm891 = vcmask 195712
        %892 = vst.msk [vmem:[#allocation2] sm:$0xff] %vm891, %v889
        %894 = vrot.lane.b32.xlu0 %v786, 24
        %v895 = vpop.permute.xlu0 %894
        %vm897 = vcmask 261312
        %898 = vst.msk [vmem:[#allocation2] sm:$0xff] %vm897, %v895
        %900 = vrot.lane.b32.xlu0 %v809, 32
        %v901 = vpop.permute.xlu0 %900
        %vm903 = vcmask 326912
        %904 = vst.msk [vmem:[#allocation2] sm:$0xff] %vm903, %v901
        %906 = vrot.lane.b32.xlu0 %v832, 40
        %v907 = vpop.permute.xlu0 %906
        %vm909 = vcmask 392512
        %910 = vst.msk [vmem:[#allocation2] sm:$0xff] %vm909, %v907
        %912 = vrot.lane.b32.xlu0 %v855, 48
        %v913 = vpop.permute.xlu0 %912
        %vm915 = vcmask 458112
        %916 = vst.msk [vmem:[#allocation2] sm:$0xff] %vm915, %v913
        %918 = vrot.lane.b32.xlu0 %v878, 56
        %v919 = vpop.permute.xlu0 %918
        %vm921 = vcmask 523712
        %922 = vst.msk [vmem:[#allocation2] sm:$0xff] %vm921, %v919
        %v923 = vld [vmem:[#allocation2] sm:$0xff]
        %v924 = vld [vmem:[#allocation3] sm:$0xff]
        %v925 = vld [vmem:[#allocation3 + $0x8] sm:$0xff]
        %v926 = vld [vmem:[#allocation3 + $0x10] sm:$0xff]
        %v927 = vld [vmem:[#allocation3 + $0x18] sm:$0xff]
        %v928 = vld [vmem:[#allocation3 + $0x20] sm:$0xff]
        %v929 = vld [vmem:[#allocation3 + $0x28] sm:$0xff]
        %v930 = vld [vmem:[#allocation3 + $0x30] sm:$0xff]
        %v931 = vld [vmem:[#allocation3 + $0x38] sm:$0xff]
        %v932 = vld [vmem:[%s4] sm:$0x1]
        %v934 = vperm.slane %v932, 0
        %v937 = vsel %vm318, %v923, 0
        %939 = vmatpush.msra.mxu0 0.0
        %940 = vmatpush.msra.mxu0 0.0
        %941 = vmatpush.msra.mxu0 0.0
        %942 = vmatpush.msra.mxu0 0.0
        %943 = vmatpush.msra.mxu0 0.0
        %944 = vmatpush.msra.mxu0 0.0
        %945 = vmatpush.msra.mxu0 0.0
        %946 = vmatpush.msra.mxu0 0.0
        %947 = vmatpush.msra.mxu0 %v931
        %948 = vmatpush.msra.mxu0 %v930
        %949 = vmatpush.msra.mxu0 %v929
        %950 = vmatpush.msra.mxu0 %v928
        %951 = vmatpush.msra.mxu0 %v927
        %952 = vmatpush.msra.mxu0 %v926
        %953 = vmatpush.msra.mxu0 %v925
        %954 = vmatpush.msra.mxu0 %v924
        %955 = vmatmul.f32.gmra.mxu0 %v937
        %v956 = vpop.f32.mrf.mxu0
        %v957 = vadd.f32 %v934, %v956
        %958 = vdwg.mxu0
        %959 = vst [vmem:[%s256] sm:$0xff] %v957
        %s960 = sand.u32 %s154, 1
        %s961 = scalar_lea.sflag [#allocation5], %s960
        %s962 = sand.u32 %s154, 1
        %s963 = smul.addr %s962, 8
        %s964 = scalar_lea.vmem [#allocation6], %s963
        // Predicated region
        $region45: #{tpu_custom_call.1} parent=39 // pred_check
          %p965 = pneg %p164
        $region46: #{tpu_custom_call.1} parent=39 // pred_check_branch
          %967 = sbr.rel (%p965) target = $region48
        $region47: #{tpu_custom_call.1} parent=39 // pred_region
          %969 = vsyncadd %s961, 0
          %s970 = smul.addr %s24, 4
          %s971 = sadd.s32 %s25, %s970
          %s972 = smul.addr %s971, 8
          %s973 = scalar_lea.hbm %s5, %s972
          %s975 = sshll.u32 %s964, 4
          %s976 = int_to_ptr.vmem [resolvable:$true] %s975
          %s977 = sshll.u32 %s973, 4
          %s978 = int_to_ptr.hbm [resolvable:$true] %s977
          %980 = dma.vmem_to_hbm [thread:$0]  %s976, 128, %s978, %s961
        $region48: #{tpu_custom_call.1} parent=39 // pred_fallthru
          _
      $region40: #{tpu_custom_call.1} parent=5 // pred_fallthru
        _
      %p981 = scmp.le.s32.totalorder 2, %s15
      // Predicated region
      $region49: #{tpu_custom_call.1} parent=5 // pred_check
        %p982 = pneg %p981
      $region50: #{tpu_custom_call.1} parent=5 // pred_check_branch
        %984 = sbr.rel (%p982) target = $region52
      $region51: #{tpu_custom_call.1} parent=5 // pred_region
        %s985 = ssub.s32 %s15, 2
        // Predicated region
        $region53: #{tpu_custom_call.1} parent=51 // pred_check
          %p986 = pneg %p170
        $region54: #{tpu_custom_call.1} parent=51 // pred_check_branch
          %988 = sbr.rel (%p986) target = $region56
        $region55: #{tpu_custom_call.1} parent=51 // pred_region
          %s989 = sand.u32 %s155, 1
          %s990 = scalar_lea.sflag [#allocation5], %s989
          %s991 = sand.u32 %s155, 1
          %s992 = smul.addr %s991, 8
          %s993 = scalar_lea.vmem [#allocation6], %s992
          %995 = dma.done %s990, 128
        $region56: #{tpu_custom_call.1} parent=51 // pred_fallthru
          _
      $region52: #{tpu_custom_call.1} parent=5 // pred_fallthru
        _
    $region6: #{tpu_custom_call.1} parent=1 // loop_footer
      %s19 = sadd.s32 1, %s15
    $region7: #{tpu_custom_call.1} parent=1 // loop_footer_branch
      %14 = sbr.rel target = $region3
    $region8: #{tpu_custom_call.1} parent=1 // loop_exit
      _
    %996 = vsyncpa [#allocation4], 1
    %s997 = scalar_lea.sflag [#allocation4], 1
    %998 = vsyncpa %s997, 1
    %999 = vsyncpa [#allocation5], 1
    %s1000 = scalar_lea.sflag [#allocation5], 1
    %1001 = vsyncpa %s1000, 1

</llo_original>
